<compile_context>
chip_gen: v6e
topology: v6e:2x2x1
jax: 0.10.0
libtpu: 0.0.40
codegen_flags: <defaults>
</compile_context>

<pallas_src>
import jax
import jax.numpy as jnp
from jax import lax
from jax.experimental import pallas as pl
from jax.experimental.pallas import tpu as pltpu

NUM_CLASSES_PER_HAND = 17
NUM_OUT = 2 * NUM_CLASSES_PER_HAND  # 34 logit channels


# ----------------------------------------------------------------------------
# Fused kernel: 1x1 conv head + per-hand max/argmax + confidence partials.
# ----------------------------------------------------------------------------
def _fused_head_kernel(x_ref, w_ref, b_ref,
                       mask_l_ref, mask_r_ref, logits_ref,
                       conf_l_ref, conf_r_ref):
    # x_ref:      (B, Cin, TILE_HW)      f32  (NCHW consumed directly; pixels on lanes)
    # w_ref:      (NUM_OUT, Cin)         f32
    # b_ref:      (NUM_OUT, 1)           f32
    # mask_*_ref: (B, TILE_HW)           i32
    # logits_ref: (B, NUM_OUT, TILE_HW)  f32  (== NCHW layout)
    # conf_*_ref: (B, 128)               f32  (lane partial sums of per-pixel maxes)
    x = x_ref[...]
    w = w_ref[...]
    b = b_ref[...]
    cin = x.shape[1]

    # 1x1 conv as an unrolled VPU multiply-add over the tiny input-channel axis.
    acc = w[None, :, 0:1] * x[:, 0:1, :]
    for c in range(1, cin):
        acc = acc + w[None, :, c:c + 1] * x[:, c:c + 1, :]
    acc = acc + b[None, :, :]                       # (B, NUM_OUT, TILE_HW)
    logits_ref[...] = acc

    def one_hand(l):
        # l: (B, 17, TILE_HW)
        maxes = jnp.max(l, axis=1, keepdims=True)   # (B, 1, TILE_HW)
        idx = lax.broadcasted_iota(jnp.int32, l.shape, 1)
        # first-occurrence argmax (matches jnp.argmax / torch.max semantics)
        pred = jnp.min(
            jnp.where(l == maxes, idx, NUM_CLASSES_PER_HAND), axis=1
        ).astype(jnp.int32)                         # (B, TILE_HW), lane-dense
        # lane-dense partial sum of the per-pixel maxes (128-wide, no relayout)
        m = maxes[:, 0, :]                          # (B, TILE_HW)
        part = m[:, 0:128]
        for k in range(1, m.shape[1] // 128):
            part = part + m[:, k * 128:(k + 1) * 128]
        return pred, part

    pred_l, part_l = one_hand(acc[:, 0:NUM_CLASSES_PER_HAND, :])
    pred_r, part_r = one_hand(acc[:, NUM_CLASSES_PER_HAND:NUM_OUT, :])
    mask_l_ref[...] = pred_l
    mask_r_ref[...] = pred_r
    conf_l_ref[...] = part_l
    conf_r_ref[...] = part_r


def fused_segm_head(x_bchw_flat, w, b, *, tile_hw):
    bsz, cin, hw_pad = x_bchw_flat.shape
    assert hw_pad % tile_hw == 0
    n_tiles = hw_pad // tile_hw
    cout = w.shape[0]
    out_shapes = (
        jax.ShapeDtypeStruct((bsz, hw_pad), jnp.int32),            # mask_l
        jax.ShapeDtypeStruct((bsz, hw_pad), jnp.int32),            # mask_r
        jax.ShapeDtypeStruct((bsz, cout, hw_pad), jnp.float32),    # logits (NCHW)
        jax.ShapeDtypeStruct((bsz, n_tiles * 128), jnp.float32),   # conf_l partials
        jax.ShapeDtypeStruct((bsz, n_tiles * 128), jnp.float32),   # conf_r partials
    )
    grid_spec = pltpu.PrefetchScalarGridSpec(
        num_scalar_prefetch=0,
        grid=(n_tiles,),
        in_specs=[
            pl.BlockSpec((bsz, cin, tile_hw), lambda t: (0, 0, t)),
            pl.BlockSpec((cout, cin), lambda t: (0, 0)),
            pl.BlockSpec((cout, 1), lambda t: (0, 0)),
        ],
        out_specs=(
            pl.BlockSpec((bsz, tile_hw), lambda t: (0, t)),
            pl.BlockSpec((bsz, tile_hw), lambda t: (0, t)),
            pl.BlockSpec((bsz, cout, tile_hw), lambda t: (0, 0, t)),
            pl.BlockSpec((bsz, 128), lambda t: (0, t)),
            pl.BlockSpec((bsz, 128), lambda t: (0, t)),
        ),
    )
    return pl.pallas_call(
        _fused_head_kernel,
        out_shape=out_shapes,
        grid_spec=grid_spec,
        compiler_params=pltpu.CompilerParams(
            dimension_semantics=("parallel",),
            vmem_limit_bytes=32 * 1024 * 1024,   # explicit; safe on v5e/v6e/v7x
        ),
    )(x_bchw_flat, w, b)


# ----------------------------------------------------------------------------
# G_XY (inference): fused head + split into left/right + masks/conf.
# ----------------------------------------------------------------------------
class GXYPallas:
    def __init__(self, key, num_channels=3, num_classes=NUM_OUT):
        k1, k2 = jax.random.split(key)
        self.num_channels = num_channels
        self.num_classes = num_classes
        self.w = 0.1 * jax.random.normal(k1, (num_classes, num_channels), jnp.float32)
        self.b = 0.01 * jax.random.normal(k2, (num_classes, 1), jnp.float32)

    def __call__(self, img_nchw, uncertain=False):
        bsz, cin, h, w = img_nchw.shape
        hw = h * w
        # NCHW consumed directly as (B, C, H*W): pure reshape, no transpose, no pad pass.
        x = img_nchw.reshape(bsz, cin, hw).astype(jnp.float32)

        # Pixel-axis tiling: >=1024 lanes per tile when the image is big enough.
        if hw >= 2048:
            tile_hw = 2048
        else:
            tile_hw = ((hw + 127) // 128) * 128
        hw_pad = pl.cdiv(hw, tile_hw) * tile_hw
        if hw_pad != hw:
            x = jnp.pad(x, ((0, 0), (0, 0), (0, hw_pad - hw)))

        mask_l, mask_r, logits, conf_l_p, conf_r_p = fused_segm_head(
            x, self.w, self.b, tile_hw=tile_hw)

        segm_mask_l = mask_l[:, :hw].reshape(bsz, h, w)
        segm_mask_r = mask_r[:, :hw].reshape(bsz, h, w)
        amodal_logits = logits[:, :, :hw].reshape(bsz, self.num_classes, h, w)

        conf_l = jnp.sum(conf_l_p, axis=1)
        conf_r = jnp.sum(conf_r_p, axis=1)
        if hw_pad != hw:
            # padded pixels have logits == bias, so each contributes max(bias_hand)
            n_pad = float(hw_pad - hw)
            conf_l = conf_l - n_pad * jnp.max(self.b[:NUM_CLASSES_PER_HAND, 0])
            conf_r = conf_r - n_pad * jnp.max(self.b[NUM_CLASSES_PER_HAND:, 0])

        amodal_logits_l = amodal_logits[:, :NUM_CLASSES_PER_HAND]
        amodal_logits_r = amodal_logits[:, NUM_CLASSES_PER_HAND:]

        segm_dict = {}
        if uncertain:
            total_conf = conf_l + conf_r
            order = jnp.argsort(-total_conf)  # descending
            segm_mask_l = segm_mask_l[order]
            segm_mask_r = segm_mask_r[order]
            segm_dict["order"] = order
        segm_dict["segm_mask_l"] = segm_mask_l
        segm_dict["segm_mask_r"] = segm_mask_r
        segm_dict["segm_logits"] = amodal_logits
        segm_dict["segm_logits_l"] = amodal_logits_l
        segm_dict["segm_logits_r"] = amodal_logits_r
        segm_dict["conf_l"] = conf_l
        segm_dict["conf_r"] = conf_r
        return {"segm_dict": segm_dict}


# ----------------------------------------------------------------------------
# ModelWrapper (inference path == forward_test): runs G2 on the input image.
# ----------------------------------------------------------------------------
class ModelWrapperPallas:
    def __init__(self, key):
        k1, k2 = jax.random.split(key)
        self.G1 = GXYPallas(k1, 3, NUM_OUT)
        self.G2 = GXYPallas(k2, 3, NUM_OUT)
        # TODO(synk): losses, Adam optimizers and the Discriminator are training-only.

    def forward_test(self, inputs):
        model_dict = self.G2(inputs["img"])
        segm_dict = model_dict["segm_dict"]
        # TODO(synk): meta_info['im_path'] string processing has no array equivalent.
        return {
            "segm_l": segm_dict["segm_mask_l"],
            "segm_r": segm_dict["segm_mask_r"],
        }


# ----------------------------------------------------------------------------
# Pure-JAX reference for correctness checking (same accumulation order).
# ----------------------------------------------------------------------------
def _reference_forward(g, img_nchw):
    bsz, cin, h, w = img_nchw.shape
    x = img_nchw.reshape(bsz, cin, h * w).astype(jnp.float32)
    acc = g.w[None, :, 0:1] * x[:, 0:1, :]
    for c in range(1, cin):
        acc = acc + g.w[None, :, c:c + 1] * x[:, c:c + 1, :]
    logits = acc + g.b[None, :, :]                       # (B, 34, HW)
    logits_nchw = logits.reshape(bsz, NUM_OUT, h, w)
    l = logits_nchw[:, :NUM_CLASSES_PER_HAND]
    r = logits_nchw[:, NUM_CLASSES_PER_HAND:]
    mask_l = jnp.argmax(l, axis=1).astype(jnp.int32)
    mask_r = jnp.argmax(r, axis=1).astype(jnp.int32)
    conf_l = jnp.max(l, axis=1).sum(axis=(1, 2))
    conf_r = jnp.max(r, axis=1).sum(axis=(1, 2))
    return mask_l, mask_r, conf_l, conf_r, logits_nchw


if __name__ == "__main__":
    key = jax.random.PRNGKey(0)
    k_model, k_img = jax.random.split(key)

    # Small shapes consistent with the module: NCHW image, 3 input channels.
    B, C, H, W = 2, 3, 16, 16
    img = jax.random.normal(k_img, (B, C, H, W), jnp.float32)

    model = ModelWrapperPallas(k_model)

    out = model.forward_test({"img": img})
    jax.block_until_ready(out)

    full = model.G2(img)
    segm_dict = full["segm_dict"]
    jax.block_until_ready(segm_dict)

    ref_l, ref_r, ref_cl, ref_cr, ref_logits = _reference_forward(model.G2, img)
    assert jnp.array_equal(out["segm_l"], ref_l), "left mask mismatch"
    assert jnp.array_equal(out["segm_r"], ref_r), "right mask mismatch"
    assert jnp.allclose(segm_dict["conf_l"], ref_cl, atol=1e-3, rtol=1e-4)
    assert jnp.allclose(segm_dict["conf_r"], ref_cr, atol=1e-3, rtol=1e-4)
    assert jnp.allclose(segm_dict["segm_logits"], ref_logits, atol=1e-4, rtol=1e-4)

    print("KERNEL_OK")
</pallas_src>

<mosaic_0001>
module attributes {stable_mosaic.version = 11 : i64} {
  func.func @_fused_head_kernel(%arg0: i32, %arg1: memref<2x3x256xf32, #tpu.memory_space<vmem>>, %arg2: memref<34x3xf32, #tpu.memory_space<vmem>>, %arg3: memref<34x1xf32, #tpu.memory_space<vmem>>, %arg4: memref<2x256xi32, #tpu.memory_space<vmem>>, %arg5: memref<2x256xi32, #tpu.memory_space<vmem>>, %arg6: memref<2x34x256xf32, #tpu.memory_space<vmem>>, %arg7: memref<2x128xf32, #tpu.memory_space<vmem>>, %arg8: memref<2x128xf32, #tpu.memory_space<vmem>>) attributes {dimension_semantics = [#tpu.dimension_semantics<parallel>], iteration_bounds = array<i64: 1>, scalar_prefetch = 0 : i64, scratch_operands = 0 : i64, tpu.core_type = #tpu.core_type<tc>, window_params = [{transform_indices = @transform_0, window_bounds = array<i64: 2, 3, 256>}, {pipeline_mode = #tpu.pipeline_mode<synchronous>, transform_indices = @transform_1, window_bounds = array<i64: 34, 3>}, {pipeline_mode = #tpu.pipeline_mode<synchronous>, transform_indices = @transform_2, window_bounds = array<i64: 34, 1>}, {transform_indices = @transform_3, window_bounds = array<i64: 2, 256>}, {transform_indices = @transform_4, window_bounds = array<i64: 2, 256>}, {transform_indices = @transform_5, window_bounds = array<i64: 2, 34, 256>}, {transform_indices = @transform_6, window_bounds = array<i64: 2, 128>}, {transform_indices = @transform_7, window_bounds = array<i64: 2, 128>}]} {
    %c0 = arith.constant 0 : index
    %c0_0 = arith.constant 0 : index
    %c0_1 = arith.constant 0 : index
    %0 = vector.load %arg1[%c0, %c0_0, %c0_1] : memref<2x3x256xf32, #tpu.memory_space<vmem>>, vector<2x3x256xf32>
    %c0_2 = arith.constant 0 : index
    %c0_3 = arith.constant 0 : index
    %1 = vector.load %arg2[%c0_2, %c0_3] : memref<34x3xf32, #tpu.memory_space<vmem>>, vector<34x3xf32>
    %c0_4 = arith.constant 0 : index
    %c0_5 = arith.constant 0 : index
    %2 = vector.load %arg3[%c0_4, %c0_5] : memref<34x1xf32, #tpu.memory_space<vmem>>, vector<34x1xf32>
    %3 = vector.extract_strided_slice %1 {offsets = [0, 0], sizes = [34, 1], strides = [1, 1]} : vector<34x3xf32> to vector<34x1xf32>
    %4 = vector.shape_cast %3 : vector<34x1xf32> to vector<1x34x1xf32>
    %5 = vector.extract_strided_slice %0 {offsets = [0, 0, 0], sizes = [2, 1, 256], strides = [1, 1, 1]} : vector<2x3x256xf32> to vector<2x1x256xf32>
    %6 = vector.broadcast %4 : vector<1x34x1xf32> to vector<2x34x256xf32>
    %7 = vector.broadcast %5 : vector<2x1x256xf32> to vector<2x34x256xf32>
    %8 = arith.mulf %6, %7 : vector<2x34x256xf32>
    %9 = vector.extract_strided_slice %1 {offsets = [0, 1], sizes = [34, 1], strides = [1, 1]} : vector<34x3xf32> to vector<34x1xf32>
    %10 = vector.shape_cast %9 : vector<34x1xf32> to vector<1x34x1xf32>
    %11 = vector.extract_strided_slice %0 {offsets = [0, 1, 0], sizes = [2, 1, 256], strides = [1, 1, 1]} : vector<2x3x256xf32> to vector<2x1x256xf32>
    %12 = vector.broadcast %10 : vector<1x34x1xf32> to vector<2x34x256xf32>
    %13 = vector.broadcast %11 : vector<2x1x256xf32> to vector<2x34x256xf32>
    %14 = arith.mulf %12, %13 : vector<2x34x256xf32>
    %15 = arith.addf %8, %14 : vector<2x34x256xf32>
    %16 = vector.extract_strided_slice %1 {offsets = [0, 2], sizes = [34, 1], strides = [1, 1]} : vector<34x3xf32> to vector<34x1xf32>
    %17 = vector.shape_cast %16 : vector<34x1xf32> to vector<1x34x1xf32>
    %18 = vector.extract_strided_slice %0 {offsets = [0, 2, 0], sizes = [2, 1, 256], strides = [1, 1, 1]} : vector<2x3x256xf32> to vector<2x1x256xf32>
    %19 = vector.broadcast %17 : vector<1x34x1xf32> to vector<2x34x256xf32>
    %20 = vector.broadcast %18 : vector<2x1x256xf32> to vector<2x34x256xf32>
    %21 = arith.mulf %19, %20 : vector<2x34x256xf32>
    %22 = arith.addf %15, %21 : vector<2x34x256xf32>
    %23 = vector.shape_cast %2 : vector<34x1xf32> to vector<1x34x1xf32>
    %24 = vector.broadcast %23 : vector<1x34x1xf32> to vector<2x34x256xf32>
    %25 = arith.addf %22, %24 : vector<2x34x256xf32>
    %c0_6 = arith.constant 0 : index
    %c0_7 = arith.constant 0 : index
    %c0_8 = arith.constant 0 : index
    %26 = vector.load %arg6[%c0_6, %c0_7, %c0_8] : memref<2x34x256xf32, #tpu.memory_space<vmem>>, vector<2x34x256xf32>
    tpu.vector_store %arg6[%c0_6, %c0_7, %c0_8], %25 {strides = array<i32>} : memref<2x34x256xf32, #tpu.memory_space<vmem>>, vector<2x34x256xf32>,
    %27 = vector.extract_strided_slice %25 {offsets = [0, 0, 0], sizes = [2, 17, 256], strides = [1, 1, 1]} : vector<2x34x256xf32> to vector<2x17x256xf32>
    %cst = arith.constant dense<0xFF800000> : vector<2x256xf32>
    %28 = vector.multi_reduction <maximumf>, %27, %cst [1] : vector<2x17x256xf32> to vector<2x256xf32>
    %29 = vector.shape_cast %28 : vector<2x256xf32> to vector<2x1x256xf32>
    %30 = tpu.iota {dimensions = array<i32: 1>} : vector<2x17x256xi32>
    %31 = vector.broadcast %29 : vector<2x1x256xf32> to vector<2x17x256xf32>
    %32 = arith.cmpf oeq, %27, %31 : vector<2x17x256xf32>
    %c17_i32 = arith.constant 17 : i32
    %33 = vector.broadcast %c17_i32 : i32 to vector<2x17x256xi32>
    %34 = arith.select %32, %30, %33 : vector<2x17x256xi1>, vector<2x17x256xi32>
    %cst_9 = arith.constant dense<2147483647> : vector<2x256xi32>
    %35 = vector.multi_reduction <minsi>, %34, %cst_9 [1] : vector<2x17x256xi32> to vector<2x256xi32>
    %36 = vector.shape_cast %29 : vector<2x1x256xf32> to vector<2x256xf32>
    %37 = vector.extract_strided_slice %36 {offsets = [0, 0], sizes = [2, 128], strides = [1, 1]} : vector<2x256xf32> to vector<2x128xf32>
    %38 = vector.extract_strided_slice %36 {offsets = [0, 128], sizes = [2, 128], strides = [1, 1]} : vector<2x256xf32> to vector<2x128xf32>
    %39 = arith.addf %37, %38 : vector<2x128xf32>
    %40 = vector.extract_strided_slice %25 {offsets = [0, 17, 0], sizes = [2, 17, 256], strides = [1, 1, 1]} : vector<2x34x256xf32> to vector<2x17x256xf32>
    %cst_10 = arith.constant dense<0xFF800000> : vector<2x256xf32>
    %41 = vector.multi_reduction <maximumf>, %40, %cst_10 [1] : vector<2x17x256xf32> to vector<2x256xf32>
    %42 = vector.shape_cast %41 : vector<2x256xf32> to vector<2x1x256xf32>
    %43 = tpu.iota {dimensions = array<i32: 1>} : vector<2x17x256xi32>
    %44 = vector.broadcast %42 : vector<2x1x256xf32> to vector<2x17x256xf32>
    %45 = arith.cmpf oeq, %40, %44 : vector<2x17x256xf32>
    %c17_i32_11 = arith.constant 17 : i32
    %46 = vector.broadcast %c17_i32_11 : i32 to vector<2x17x256xi32>
    %47 = arith.select %45, %43, %46 : vector<2x17x256xi1>, vector<2x17x256xi32>
    %cst_12 = arith.constant dense<2147483647> : vector<2x256xi32>
    %48 = vector.multi_reduction <minsi>, %47, %cst_12 [1] : vector<2x17x256xi32> to vector<2x256xi32>
    %49 = vector.shape_cast %42 : vector<2x1x256xf32> to vector<2x256xf32>
    %50 = vector.extract_strided_slice %49 {offsets = [0, 0], sizes = [2, 128], strides = [1, 1]} : vector<2x256xf32> to vector<2x128xf32>
    %51 = vector.extract_strided_slice %49 {offsets = [0, 128], sizes = [2, 128], strides = [1, 1]} : vector<2x256xf32> to vector<2x128xf32>
    %52 = arith.addf %50, %51 : vector<2x128xf32>
    %c0_13 = arith.constant 0 : index
    %c0_14 = arith.constant 0 : index
    %53 = vector.load %arg4[%c0_13, %c0_14] : memref<2x256xi32, #tpu.memory_space<vmem>>, vector<2x256xi32>
    tpu.vector_store %arg4[%c0_13, %c0_14], %35 {strides = array<i32>} : memref<2x256xi32, #tpu.memory_space<vmem>>, vector<2x256xi32>,
    %c0_15 = arith.constant 0 : index
    %c0_16 = arith.constant 0 : index
    %54 = vector.load %arg5[%c0_15, %c0_16] : memref<2x256xi32, #tpu.memory_space<vmem>>, vector<2x256xi32>
    tpu.vector_store %arg5[%c0_15, %c0_16], %48 {strides = array<i32>} : memref<2x256xi32, #tpu.memory_space<vmem>>, vector<2x256xi32>,
    %c0_17 = arith.constant 0 : index
    %c0_18 = arith.constant 0 : index
    %55 = vector.load %arg7[%c0_17, %c0_18] : memref<2x128xf32, #tpu.memory_space<vmem>>, vector<2x128xf32>
    tpu.vector_store %arg7[%c0_17, %c0_18], %39 {strides = array<i32>} : memref<2x128xf32, #tpu.memory_space<vmem>>, vector<2x128xf32>,
    %c0_19 = arith.constant 0 : index
    %c0_20 = arith.constant 0 : index
    %56 = vector.load %arg8[%c0_19, %c0_20] : memref<2x128xf32, #tpu.memory_space<vmem>>, vector<2x128xf32>
    tpu.vector_store %arg8[%c0_19, %c0_20], %52 {strides = array<i32>} : memref<2x128xf32, #tpu.memory_space<vmem>>, vector<2x128xf32>,
    return
  }
  func.func @transform_0(%arg0: i32) -> (i32, i32, i32) {
    %c0_i32 = arith.constant 0 : i32
    %c0_i32_0 = arith.constant 0 : i32
    %c0_i32_1 = arith.constant 0 : i32
    return %c0_i32, %c0_i32_0, %arg0 : i32, i32, i32
  }
  func.func @transform_1(%arg0: i32) -> (i32, i32) {
    %c0_i32 = arith.constant 0 : i32
    %c0_i32_0 = arith.constant 0 : i32
    %c0_i32_1 = arith.constant 0 : i32
    return %c0_i32, %c0_i32_0 : i32, i32
  }
  func.func @transform_2(%arg0: i32) -> (i32, i32) {
    %c0_i32 = arith.constant 0 : i32
    %c0_i32_0 = arith.constant 0 : i32
    %c0_i32_1 = arith.constant 0 : i32
    return %c0_i32, %c0_i32_0 : i32, i32
  }
  func.func @transform_3(%arg0: i32) -> (i32, i32) {
    %c0_i32 = arith.constant 0 : i32
    %c0_i32_0 = arith.constant 0 : i32
    return %c0_i32, %arg0 : i32, i32
  }
  func.func @transform_4(%arg0: i32) -> (i32, i32) {
    %c0_i32 = arith.constant 0 : i32
    %c0_i32_0 = arith.constant 0 : i32
    return %c0_i32, %arg0 : i32, i32
  }
  func.func @transform_5(%arg0: i32) -> (i32, i32, i32) {
    %c0_i32 = arith.constant 0 : i32
    %c0_i32_0 = arith.constant 0 : i32
    %c0_i32_1 = arith.constant 0 : i32
    return %c0_i32, %c0_i32_0, %arg0 : i32, i32, i32
  }
  func.func @transform_6(%arg0: i32) -> (i32, i32) {
    %c0_i32 = arith.constant 0 : i32
    %c0_i32_0 = arith.constant 0 : i32
    return %c0_i32, %arg0 : i32, i32
  }
  func.func @transform_7(%arg0: i32) -> (i32, i32) {
    %c0_i32 = arith.constant 0 : i32
    %c0_i32_0 = arith.constant 0 : i32
    return %c0_i32, %arg0 : i32, i32
  }
}

</mosaic_0001>

<llo_original>
// kernel: tpu_custom_call.1
$region0: #{tpu_custom_call.1}
  #allocation0 [shape = 'u32[]', space=smem, size = 0x4, offset = 0x4, fixed_abs, tag = 'smem constant byte address 0x4 - core index']
  #allocation1 [shape = 'u32[144,128]{1,0:T(1,128)}', space=vmem, size = 0x12000, scoped, tag = 'internal scratch']
  %s0 = inlined_call_operand.vmem [shape: f32[2,3,256], index: 0, kind: input, shape index: {}]
  %s1 = inlined_call_operand.vmem [shape: f32[34,3], index: 1, kind: input, shape index: {}]
  %s2 = inlined_call_operand.vmem [shape: f32[34,1], index: 2, kind: input, shape index: {}]
  %s3 = inlined_call_operand.hbm [shape: s32[2,256], index: 3, kind: output, shape index: {0}]
  %s4 = inlined_call_operand.hbm [shape: s32[2,256], index: 4, kind: output, shape index: {1}]
  %s5 = inlined_call_operand.vmem [shape: f32[2,34,256], index: 5, kind: output, shape index: {2}]
  %s6 = inlined_call_operand.hbm [shape: f32[2,128], index: 6, kind: output, shape index: {3}]
  %s7 = inlined_call_operand.hbm [shape: f32[2,128], index: 7, kind: output, shape index: {4}]
  %8 = xla_tuple %s3, %s4, %s5, %s6, %s7
  %s9 = sld [smem:[#allocation0]]
  $region54: #{tpu_custom_call.1} parent=0
    _
  %s11 = ssub.s32 1, %s9
  %s12 = scalar_select 0, %s11, %s9
  $region1: #{tpu_custom_call.1} parent=0
    #allocation2 [shape = 'u8[2048]{0}', space=vmem, size = 0x800, scoped, tag = 'output window, operand 0, single buffered']
    #allocation3 [shape = 's32[1]{0}', space=sflag, size = 0x4, scoped, tag = 'scoped memory for tpu_custom_call.1']
    #allocation4 [shape = 'u8[2048]{0}', space=vmem, size = 0x800, scoped, tag = 'output window, operand 1, single buffered']
    #allocation5 [shape = 's32[1]{0}', space=sflag, size = 0x4, scoped, tag = 'scoped memory for tpu_custom_call.1']
    #allocation6 [shape = 'u8[1024]{0}', space=vmem, size = 0x400, scoped, tag = 'output window, operand 3, single buffered']
    #allocation7 [shape = 'u8[1024]{0}', space=vmem, size = 0x400, scoped, tag = 'output window, operand 4, single buffered']
    #allocation8 [shape = 's32[1]{0}', space=sflag, size = 0x4, scoped, tag = 'scoped memory for tpu_custom_call.1']
    %13 = vsyncpa [#allocation3], 0
    %14 = vsyncpa [#allocation5], 0
    %15 = vsyncpa [#allocation8], 0
    // Predicated region
    $region2: #{tpu_custom_call.1} parent=1 // pred_check
      _
    $region3: #{tpu_custom_call.1} parent=1 // pred_check_branch
      %17 = sbr.rel (0) target = $region5
    $region4: #{tpu_custom_call.1} parent=1 // pred_region
      _
    $region5: #{tpu_custom_call.1} parent=1 // pred_fallthru
      _
    // Predicated region
    $region6: #{tpu_custom_call.1} parent=1 // pred_check
      _
    $region7: #{tpu_custom_call.1} parent=1 // pred_check_branch
      %19 = sbr.rel (0) target = $region9
    $region8: #{tpu_custom_call.1} parent=1 // pred_region
      _
    $region9: #{tpu_custom_call.1} parent=1 // pred_fallthru
      _
    // Predicated region
    $region10: #{tpu_custom_call.1} parent=1 // pred_check
      _
    $region11: #{tpu_custom_call.1} parent=1 // pred_check_branch
      %21 = sbr.rel (0) target = $region13
    $region12: #{tpu_custom_call.1} parent=1 // pred_region
      _
    $region13: #{tpu_custom_call.1} parent=1 // pred_fallthru
      _
    %v22 = vld [vmem:[%s0] sm:$0x77]
    %v23 = vld [vmem:[%s0 + $0x8] sm:$0x77]
    %v24 = vld [vmem:[%s1] sm:$0xff]
    %v25 = vld [vmem:[%s1 + $0x8] sm:$0xff]
    %v26 = vld [vmem:[%s1 + $0x10] sm:$0xff]
    %v27 = vld [vmem:[%s1 + $0x18] sm:$0xff]
    %v28 = vld [vmem:[%s1 + $0x20] sm:$0x3]
    %v29 = vld [vmem:[%s2] sm:$0xff]
    %v30 = vld [vmem:[%s2 + $0x8] sm:$0xff]
    %v31 = vld [vmem:[%s2 + $0x10] sm:$0xff]
    %v32 = vld [vmem:[%s2 + $0x18] sm:$0xff]
    %v33 = vld [vmem:[%s2 + $0x20] sm:$0x3]
    %35 = vset.pattern.permute.xlu0 0
    %36 = vperm.xlu0 %35, %v24
    %v37 = vpop.permute.xlu0 %36
    %40 = vset.pattern.permute.xlu0 0
    %41 = vperm.xlu0 %40, %v25
    %v42 = vpop.permute.xlu0 %41
    %45 = vset.pattern.permute.xlu0 0
    %46 = vperm.xlu0 %45, %v26
    %v47 = vpop.permute.xlu0 %46
    %50 = vset.pattern.permute.xlu0 0
    %51 = vperm.xlu0 %50, %v27
    %v52 = vpop.permute.xlu0 %51
    %55 = vset.pattern.permute.xlu0 0
    %56 = vperm.xlu0 %55, %v28
    %v57 = vpop.permute.xlu0 %56
    %v61 = vlaneseq
    %v62 = vshrl.u32 %v61, 7
    %v63 = vsub.s32 0, %v62
    %v64 = vrot.slane %v22, %v63
    %v65 = vlaneseq
    %v66 = vshrl.u32 %v65, 7
    %v67 = vsub.s32 4, %v66
    %v68 = vrot.slane %v22, %v67
    %v69 = vlaneseq
    %v70 = vshrl.u32 %v69, 7
    %v71 = vsub.s32 0, %v70
    %v72 = vrot.slane %v23, %v71
    %v73 = vlaneseq
    %v74 = vshrl.u32 %v73, 7
    %v75 = vsub.s32 4, %v74
    %v76 = vrot.slane %v23, %v75
    %v81 = vlaneseq
    %v82 = vshrl.u32 %v81, 7
    %v83 = vsub.s32 0, %v82
    %v84 = vrot.slane %v64, %v83
    %v85 = vlaneseq
    %v86 = vshrl.u32 %v85, 7
    %v87 = vsub.s32 0, %v86
    %v88 = vrot.slane %v68, %v87
    %v89 = vlaneseq
    %v90 = vshrl.u32 %v89, 7
    %v91 = vsub.s32 0, %v90
    %v92 = vrot.slane %v72, %v91
    %v93 = vlaneseq
    %v94 = vshrl.u32 %v93, 7
    %v95 = vsub.s32 0, %v94
    %v96 = vrot.slane %v76, %v95
    %v97 = vmul.f32 %v37, %v84
    %v98 = vmul.f32 %v37, %v88
    %v99 = vmul.f32 %v42, %v84
    %v100 = vmul.f32 %v42, %v88
    %v101 = vmul.f32 %v47, %v84
    %v102 = vmul.f32 %v47, %v88
    %v103 = vmul.f32 %v52, %v84
    %v104 = vmul.f32 %v52, %v88
    %v105 = vmul.f32 %v57, %v84
    %v106 = vmul.f32 %v57, %v88
    %v107 = vmul.f32 %v37, %v92
    %v108 = vmul.f32 %v37, %v96
    %v109 = vmul.f32 %v42, %v92
    %v110 = vmul.f32 %v42, %v96
    %v111 = vmul.f32 %v47, %v92
    %v112 = vmul.f32 %v47, %v96
    %v113 = vmul.f32 %v52, %v92
    %v114 = vmul.f32 %v52, %v96
    %v115 = vmul.f32 %v57, %v92
    %v116 = vmul.f32 %v57, %v96
    %117 = vset.pattern.permute.xlu0 1
    %118 = vperm.xlu0 %117, %v24
    %v119 = vpop.permute.xlu0 %118
    %121 = vset.pattern.permute.xlu0 1
    %122 = vperm.xlu0 %121, %v25
    %v123 = vpop.permute.xlu0 %122
    %125 = vset.pattern.permute.xlu0 1
    %126 = vperm.xlu0 %125, %v26
    %v127 = vpop.permute.xlu0 %126
    %129 = vset.pattern.permute.xlu0 1
    %130 = vperm.xlu0 %129, %v27
    %v131 = vpop.permute.xlu0 %130
    %133 = vset.pattern.permute.xlu0 1
    %134 = vperm.xlu0 %133, %v28
    %v135 = vpop.permute.xlu0 %134
    %v137 = vlaneseq
    %v138 = vshrl.u32 %v137, 7
    %v139 = vsub.s32 1, %v138
    %v140 = vrot.slane %v22, %v139
    %v141 = vlaneseq
    %v142 = vshrl.u32 %v141, 7
    %v143 = vsub.s32 5, %v142
    %v144 = vrot.slane %v22, %v143
    %v145 = vlaneseq
    %v146 = vshrl.u32 %v145, 7
    %v147 = vsub.s32 1, %v146
    %v148 = vrot.slane %v23, %v147
    %v149 = vlaneseq
    %v150 = vshrl.u32 %v149, 7
    %v151 = vsub.s32 5, %v150
    %v152 = vrot.slane %v23, %v151
    %v157 = vlaneseq
    %v158 = vshrl.u32 %v157, 7
    %v159 = vsub.s32 1, %v158
    %v160 = vrot.slane %v140, %v159
    %v161 = vlaneseq
    %v162 = vshrl.u32 %v161, 7
    %v163 = vsub.s32 1, %v162
    %v164 = vrot.slane %v144, %v163
    %v165 = vlaneseq
    %v166 = vshrl.u32 %v165, 7
    %v167 = vsub.s32 1, %v166
    %v168 = vrot.slane %v148, %v167
    %v169 = vlaneseq
    %v170 = vshrl.u32 %v169, 7
    %v171 = vsub.s32 1, %v170
    %v172 = vrot.slane %v152, %v171
    %v173 = vmul.f32 %v119, %v160
    %v174 = vmul.f32 %v119, %v164
    %v175 = vmul.f32 %v123, %v160
    %v176 = vmul.f32 %v123, %v164
    %v177 = vmul.f32 %v127, %v160
    %v178 = vmul.f32 %v127, %v164
    %v179 = vmul.f32 %v131, %v160
    %v180 = vmul.f32 %v131, %v164
    %v181 = vmul.f32 %v135, %v160
    %v182 = vmul.f32 %v135, %v164
    %v183 = vmul.f32 %v119, %v168
    %v184 = vmul.f32 %v119, %v172
    %v185 = vmul.f32 %v123, %v168
    %v186 = vmul.f32 %v123, %v172
    %v187 = vmul.f32 %v127, %v168
    %v188 = vmul.f32 %v127, %v172
    %v189 = vmul.f32 %v131, %v168
    %v190 = vmul.f32 %v131, %v172
    %v191 = vmul.f32 %v135, %v168
    %v192 = vmul.f32 %v135, %v172
    %v193 = vadd.f32 %v97, %v173
    %v194 = vadd.f32 %v98, %v174
    %v195 = vadd.f32 %v99, %v175
    %v196 = vadd.f32 %v100, %v176
    %v197 = vadd.f32 %v101, %v177
    %v198 = vadd.f32 %v102, %v178
    %v199 = vadd.f32 %v103, %v179
    %v200 = vadd.f32 %v104, %v180
    %v201 = vadd.f32 %v105, %v181
    %v202 = vadd.f32 %v106, %v182
    %v203 = vadd.f32 %v107, %v183
    %v204 = vadd.f32 %v108, %v184
    %v205 = vadd.f32 %v109, %v185
    %v206 = vadd.f32 %v110, %v186
    %v207 = vadd.f32 %v111, %v187
    %v208 = vadd.f32 %v112, %v188
    %v209 = vadd.f32 %v113, %v189
    %v210 = vadd.f32 %v114, %v190
    %v211 = vadd.f32 %v115, %v191
    %v212 = vadd.f32 %v116, %v192
    %213 = vset.pattern.permute.xlu0 2
    %214 = vperm.xlu0 %213, %v24
    %v215 = vpop.permute.xlu0 %214
    %217 = vset.pattern.permute.xlu0 2
    %218 = vperm.xlu0 %217, %v25
    %v219 = vpop.permute.xlu0 %218
    %221 = vset.pattern.permute.xlu0 2
    %222 = vperm.xlu0 %221, %v26
    %v223 = vpop.permute.xlu0 %222
    %225 = vset.pattern.permute.xlu0 2
    %226 = vperm.xlu0 %225, %v27
    %v227 = vpop.permute.xlu0 %226
    %229 = vset.pattern.permute.xlu0 2
    %230 = vperm.xlu0 %229, %v28
    %v231 = vpop.permute.xlu0 %230
    %v233 = vlaneseq
    %v234 = vshrl.u32 %v233, 7
    %v235 = vsub.s32 2, %v234
    %v236 = vrot.slane %v22, %v235
    %v237 = vlaneseq
    %v238 = vshrl.u32 %v237, 7
    %v239 = vsub.s32 6, %v238
    %v240 = vrot.slane %v22, %v239
    %v241 = vlaneseq
    %v242 = vshrl.u32 %v241, 7
    %v243 = vsub.s32 2, %v242
    %v244 = vrot.slane %v23, %v243
    %v245 = vlaneseq
    %v246 = vshrl.u32 %v245, 7
    %v247 = vsub.s32 6, %v246
    %v248 = vrot.slane %v23, %v247
    %v253 = vlaneseq
    %v254 = vshrl.u32 %v253, 7
    %v255 = vsub.s32 2, %v254
    %v256 = vrot.slane %v236, %v255
    %v257 = vlaneseq
    %v258 = vshrl.u32 %v257, 7
    %v259 = vsub.s32 2, %v258
    %v260 = vrot.slane %v240, %v259
    %v261 = vlaneseq
    %v262 = vshrl.u32 %v261, 7
    %v263 = vsub.s32 2, %v262
    %v264 = vrot.slane %v244, %v263
    %v265 = vlaneseq
    %v266 = vshrl.u32 %v265, 7
    %v267 = vsub.s32 2, %v266
    %v268 = vrot.slane %v248, %v267
    %v269 = vmul.f32 %v215, %v256
    %v270 = vmul.f32 %v215, %v260
    %v271 = vmul.f32 %v219, %v256
    %v272 = vmul.f32 %v219, %v260
    %v273 = vmul.f32 %v223, %v256
    %v274 = vmul.f32 %v223, %v260
    %v275 = vmul.f32 %v227, %v256
    %v276 = vmul.f32 %v227, %v260
    %v277 = vmul.f32 %v231, %v256
    %v278 = vmul.f32 %v231, %v260
    %v279 = vmul.f32 %v215, %v264
    %v280 = vmul.f32 %v215, %v268
    %v281 = vmul.f32 %v219, %v264
    %v282 = vmul.f32 %v219, %v268
    %v283 = vmul.f32 %v223, %v264
    %v284 = vmul.f32 %v223, %v268
    %v285 = vmul.f32 %v227, %v264
    %v286 = vmul.f32 %v227, %v268
    %v287 = vmul.f32 %v231, %v264
    %v288 = vmul.f32 %v231, %v268
    %v289 = vadd.f32 %v193, %v269
    %v290 = vadd.f32 %v194, %v270
    %v291 = vadd.f32 %v195, %v271
    %v292 = vadd.f32 %v196, %v272
    %v293 = vadd.f32 %v197, %v273
    %v294 = vadd.f32 %v198, %v274
    %v295 = vadd.f32 %v199, %v275
    %v296 = vadd.f32 %v200, %v276
    %v297 = vadd.f32 %v201, %v277
    %v298 = vadd.f32 %v202, %v278
    %v299 = vadd.f32 %v203, %v279
    %v300 = vadd.f32 %v204, %v280
    %v301 = vadd.f32 %v205, %v281
    %v302 = vadd.f32 %v206, %v282
    %v303 = vadd.f32 %v207, %v283
    %v304 = vadd.f32 %v208, %v284
    %v305 = vadd.f32 %v209, %v285
    %v306 = vadd.f32 %v210, %v286
    %v307 = vadd.f32 %v211, %v287
    %v308 = vadd.f32 %v212, %v288
    %310 = vset.pattern.permute.xlu0 0
    %311 = vperm.xlu0 %310, %v29
    %v312 = vpop.permute.xlu0 %311
    %315 = vset.pattern.permute.xlu0 0
    %316 = vperm.xlu0 %315, %v30
    %v317 = vpop.permute.xlu0 %316
    %320 = vset.pattern.permute.xlu0 0
    %321 = vperm.xlu0 %320, %v31
    %v322 = vpop.permute.xlu0 %321
    %325 = vset.pattern.permute.xlu0 0
    %326 = vperm.xlu0 %325, %v32
    %v327 = vpop.permute.xlu0 %326
    %330 = vset.pattern.permute.xlu0 0
    %331 = vperm.xlu0 %330, %v33
    %v332 = vpop.permute.xlu0 %331
    %v334 = vadd.f32 %v289, %v312
    %v335 = vadd.f32 %v290, %v312
    %v336 = vadd.f32 %v291, %v317
    %v337 = vadd.f32 %v292, %v317
    %v338 = vadd.f32 %v293, %v322
    %v339 = vadd.f32 %v294, %v322
    %v340 = vadd.f32 %v295, %v327
    %v341 = vadd.f32 %v296, %v327
    %v342 = vadd.f32 %v297, %v332
    %v343 = vadd.f32 %v298, %v332
    %v344 = vadd.f32 %v299, %v312
    %v345 = vadd.f32 %v300, %v312
    %v346 = vadd.f32 %v301, %v317
    %v347 = vadd.f32 %v302, %v317
    %v348 = vadd.f32 %v303, %v322
    %v349 = vadd.f32 %v304, %v322
    %v350 = vadd.f32 %v305, %v327
    %v351 = vadd.f32 %v306, %v327
    %v352 = vadd.f32 %v307, %v332
    %v353 = vadd.f32 %v308, %v332
    %354 = vst [vmem:[%s5] sm:$0xff] %v334
    %355 = vst [vmem:[%s5 + $0x8] sm:$0xff] %v335
    %356 = vst [vmem:[%s5 + $0x10] sm:$0xff] %v336
    %357 = vst [vmem:[%s5 + $0x18] sm:$0xff] %v337
    %358 = vst [vmem:[%s5 + $0x20] sm:$0xff] %v338
    %359 = vst [vmem:[%s5 + $0x28] sm:$0xff] %v339
    %360 = vst [vmem:[%s5 + $0x30] sm:$0xff] %v340
    %361 = vst [vmem:[%s5 + $0x38] sm:$0xff] %v341
    %362 = vst [vmem:[%s5 + $0x40] sm:$0x3] %v342
    %363 = vst [vmem:[%s5 + $0x48] sm:$0x3] %v343
    %364 = vst [vmem:[%s5 + $0x50] sm:$0xff] %v344
    %365 = vst [vmem:[%s5 + $0x58] sm:$0xff] %v345
    %366 = vst [vmem:[%s5 + $0x60] sm:$0xff] %v346
    %367 = vst [vmem:[%s5 + $0x68] sm:$0xff] %v347
    %368 = vst [vmem:[%s5 + $0x70] sm:$0xff] %v348
    %369 = vst [vmem:[%s5 + $0x78] sm:$0xff] %v349
    %370 = vst [vmem:[%s5 + $0x80] sm:$0xff] %v350
    %371 = vst [vmem:[%s5 + $0x88] sm:$0xff] %v351
    %372 = vst [vmem:[%s5 + $0x90] sm:$0x3] %v352
    %373 = vst [vmem:[%s5 + $0x98] sm:$0x3] %v353
    %v374 = vmax.f32 %v334, %v336
    %vm375 = vcmask 1040384
    %v376 = vsel %vm375, %v338, -inf
    %v377 = vmax.f32 %v374, %v376
    %v378 = vrot.slane %v377, 4
    %v379 = vmax.f32 %v377, %v378
    %v380 = vrot.slane %v379, 2
    %v381 = vmax.f32 %v379, %v380
    %v382 = vrot.slane %v381, 1
    %v383 = vmax.f32 %v381, %v382
    %v384 = vmax.f32 %v335, %v337
    %v385 = vsel %vm375, %v339, -inf
    %v386 = vmax.f32 %v384, %v385
    %v387 = vrot.slane %v386, 4
    %v388 = vmax.f32 %v386, %v387
    %v389 = vrot.slane %v388, 2
    %v390 = vmax.f32 %v388, %v389
    %v391 = vrot.slane %v390, 1
    %v392 = vmax.f32 %v390, %v391
    %v393 = vmax.f32 %v344, %v346
    %v394 = vsel %vm375, %v348, -inf
    %v395 = vmax.f32 %v393, %v394
    %v396 = vrot.slane %v395, 4
    %v397 = vmax.f32 %v395, %v396
    %v398 = vrot.slane %v397, 2
    %v399 = vmax.f32 %v397, %v398
    %v400 = vrot.slane %v399, 1
    %v401 = vmax.f32 %v399, %v400
    %v402 = vmax.f32 %v345, %v347
    %v403 = vsel %vm375, %v349, -inf
    %v404 = vmax.f32 %v402, %v403
    %v405 = vrot.slane %v404, 4
    %v406 = vmax.f32 %v404, %v405
    %v407 = vrot.slane %v406, 2
    %v408 = vmax.f32 %v406, %v407
    %v409 = vrot.slane %v408, 1
    %v410 = vmax.f32 %v408, %v409
    %v411 = vlaneseq
    %v412 = vshrl.u32 %v411, 7
    %v413 = vadd.s32 %v412, 8
    %v414 = vadd.s32 %v412, 16
    %vm415 = vcmp.eq.f32.partialorder %v334, %v383
    %vm416 = vcmp.eq.f32.partialorder %v335, %v392
    %vm417 = vcmp.eq.f32.partialorder %v336, %v383
    %vm418 = vcmp.eq.f32.partialorder %v337, %v392
    %vm419 = vcmp.eq.f32.partialorder %v338, %v383
    %vm420 = vcmp.eq.f32.partialorder %v339, %v392
    %vm421 = vcmp.eq.f32.partialorder %v344, %v401
    %vm422 = vcmp.eq.f32.partialorder %v345, %v410
    %vm423 = vcmp.eq.f32.partialorder %v346, %v401
    %vm424 = vcmp.eq.f32.partialorder %v347, %v410
    %vm425 = vcmp.eq.f32.partialorder %v348, %v401
    %vm426 = vcmp.eq.f32.partialorder %v349, %v410
    %v427 = vsel %vm415, %v412, 17
    %v428 = vsel %vm416, %v412, 17
    %v429 = vsel %vm417, %v413, 17
    %v430 = vsel %vm418, %v413, 17
    %v431 = vsel %vm419, %v414, 17
    %v432 = vsel %vm420, %v414, 17
    %v433 = vsel %vm421, %v412, 17
    %v434 = vsel %vm422, %v412, 17
    %v435 = vsel %vm423, %v413, 17
    %v436 = vsel %vm424, %v413, 17
    %v437 = vsel %vm425, %v414, 17
    %v438 = vsel %vm426, %v414, 17
    %vm439 = vcmp.lt.s32.totalorder %v427, %v429
    %v440 = vsel %vm439, %v427, %v429
    %v441 = vsel %vm375, %v431, 2147483647
    %vm442 = vcmp.lt.s32.totalorder %v440, %v441
    %v443 = vsel %vm442, %v440, %v441
    %v444 = vrot.slane %v443, 4
    %vm445 = vcmp.lt.s32.totalorder %v443, %v444
    %v446 = vsel %vm445, %v443, %v444
    %v447 = vrot.slane %v446, 2
    %vm448 = vcmp.lt.s32.totalorder %v446, %v447
    %v449 = vsel %vm448, %v446, %v447
    %v450 = vrot.slane %v449, 1
    %vm451 = vcmp.lt.s32.totalorder %v449, %v450
    %v452 = vsel %vm451, %v449, %v450
    %vm453 = vcmp.lt.s32.totalorder %v428, %v430
    %v454 = vsel %vm453, %v428, %v430
    %v455 = vsel %vm375, %v432, 2147483647
    %vm456 = vcmp.lt.s32.totalorder %v454, %v455
    %v457 = vsel %vm456, %v454, %v455
    %v458 = vrot.slane %v457, 4
    %vm459 = vcmp.lt.s32.totalorder %v457, %v458
    %v460 = vsel %vm459, %v457, %v458
    %v461 = vrot.slane %v460, 2
    %vm462 = vcmp.lt.s32.totalorder %v460, %v461
    %v463 = vsel %vm462, %v460, %v461
    %v464 = vrot.slane %v463, 1
    %vm465 = vcmp.lt.s32.totalorder %v463, %v464
    %v466 = vsel %vm465, %v463, %v464
    %vm467 = vcmp.lt.s32.totalorder %v433, %v435
    %v468 = vsel %vm467, %v433, %v435
    %v469 = vsel %vm375, %v437, 2147483647
    %vm470 = vcmp.lt.s32.totalorder %v468, %v469
    %v471 = vsel %vm470, %v468, %v469
    %v472 = vrot.slane %v471, 4
    %vm473 = vcmp.lt.s32.totalorder %v471, %v472
    %v474 = vsel %vm473, %v471, %v472
    %v475 = vrot.slane %v474, 2
    %vm476 = vcmp.lt.s32.totalorder %v474, %v475
    %v477 = vsel %vm476, %v474, %v475
    %v478 = vrot.slane %v477, 1
    %vm479 = vcmp.lt.s32.totalorder %v477, %v478
    %v480 = vsel %vm479, %v477, %v478
    %vm481 = vcmp.lt.s32.totalorder %v434, %v436
    %v482 = vsel %vm481, %v434, %v436
    %v483 = vsel %vm375, %v438, 2147483647
    %vm484 = vcmp.lt.s32.totalorder %v482, %v483
    %v485 = vsel %vm484, %v482, %v483
    %v486 = vrot.slane %v485, 4
    %vm487 = vcmp.lt.s32.totalorder %v485, %v486
    %v488 = vsel %vm487, %v485, %v486
    %v489 = vrot.slane %v488, 2
    %vm490 = vcmp.lt.s32.totalorder %v488, %v489
    %v491 = vsel %vm490, %v488, %v489
    %v492 = vrot.slane %v491, 1
    %vm493 = vcmp.lt.s32.totalorder %v491, %v492
    %v494 = vsel %vm493, %v491, %v492
    %v495 = vadd.f32 %v383, %v392
    %v496 = vadd.f32 %v401, %v410
    %vm497 = vcmask 1047553
    %v498 = vsel %vm497, %v338, -inf
    %v499 = vmax.f32 %v498, %v340
    %vm500 = vcmask 1041408
    %v501 = vsel %vm500, %v342, -inf
    %v502 = vmax.f32 %v499, %v501
    %v503 = vrot.slane %v502, 4
    %v504 = vmax.f32 %v502, %v503
    %v505 = vrot.slane %v504, 2
    %v506 = vmax.f32 %v504, %v505
    %v507 = vrot.slane %v506, 1
    %v508 = vmax.f32 %v506, %v507
    %v509 = vsel %vm497, %v339, -inf
    %v510 = vmax.f32 %v509, %v341
    %v511 = vsel %vm500, %v343, -inf
    %v512 = vmax.f32 %v510, %v511
    %v513 = vrot.slane %v512, 4
    %v514 = vmax.f32 %v512, %v513
    %v515 = vrot.slane %v514, 2
    %v516 = vmax.f32 %v514, %v515
    %v517 = vrot.slane %v516, 1
    %v518 = vmax.f32 %v516, %v517
    %v519 = vsel %vm497, %v348, -inf
    %v520 = vmax.f32 %v519, %v350
    %v521 = vsel %vm500, %v352, -inf
    %v522 = vmax.f32 %v520, %v521
    %v523 = vrot.slane %v522, 4
    %v524 = vmax.f32 %v522, %v523
    %v525 = vrot.slane %v524, 2
    %v526 = vmax.f32 %v524, %v525
    %v527 = vrot.slane %v526, 1
    %v528 = vmax.f32 %v526, %v527
    %v529 = vsel %vm497, %v349, -inf
    %v530 = vmax.f32 %v529, %v351
    %v531 = vsel %vm500, %v353, -inf
    %v532 = vmax.f32 %v530, %v531
    %v533 = vrot.slane %v532, 4
    %v534 = vmax.f32 %v532, %v533
    %v535 = vrot.slane %v534, 2
    %v536 = vmax.f32 %v534, %v535
    %v537 = vrot.slane %v536, 1
    %v538 = vmax.f32 %v536, %v537
    %vm539 = vcmp.eq.f32.partialorder %v338, %v508
    %vm540 = vcmp.eq.f32.partialorder %v339, %v518
    %vm541 = vcmp.eq.f32.partialorder %v340, %v508
    %vm542 = vcmp.eq.f32.partialorder %v341, %v518
    %vm543 = vcmp.eq.f32.partialorder %v342, %v508
    %vm544 = vcmp.eq.f32.partialorder %v343, %v518
    %vm545 = vcmp.eq.f32.partialorder %v348, %v528
    %vm546 = vcmp.eq.f32.partialorder %v349, %v538
    %vm547 = vcmp.eq.f32.partialorder %v350, %v528
    %vm548 = vcmp.eq.f32.partialorder %v351, %v538
    %vm549 = vcmp.eq.f32.partialorder %v352, %v528
    %vm550 = vcmp.eq.f32.partialorder %v353, %v538
    %v551 = vrot.slane %v412, 7
    %v552 = vrot.slane %v413, 7
    %v553 = vsel %vm375, %v551, %v552
    %v554 = vrot.slane %v414, 7
    %v555 = vsel %vm375, %v552, %v554
    %v556 = vsel %vm539, %v551, 17
    %v557 = vsel %vm540, %v551, 17
    %v558 = vsel %vm541, %v553, 17
    %v559 = vsel %vm542, %v553, 17
    %v560 = vsel %vm543, %v555, 17
    %v561 = vsel %vm544, %v555, 17
    %v562 = vsel %vm545, %v551, 17
    %v563 = vsel %vm546, %v551, 17
    %v564 = vsel %vm547, %v553, 17
    %v565 = vsel %vm548, %v553, 17
    %v566 = vsel %vm549, %v555, 17
    %v567 = vsel %vm550, %v555, 17
    %v568 = vsel %vm497, %v556, 2147483647
    %vm569 = vcmp.lt.s32.totalorder %v568, %v558
    %v570 = vsel %vm569, %v568, %v558
    %v571 = vsel %vm500, %v560, 2147483647
    %vm572 = vcmp.lt.s32.totalorder %v570, %v571
    %v573 = vsel %vm572, %v570, %v571
    %v574 = vrot.slane %v573, 4
    %vm575 = vcmp.lt.s32.totalorder %v573, %v574
    %v576 = vsel %vm575, %v573, %v574
    %v577 = vrot.slane %v576, 2
    %vm578 = vcmp.lt.s32.totalorder %v576, %v577
    %v579 = vsel %vm578, %v576, %v577
    %v580 = vrot.slane %v579, 1
    %vm581 = vcmp.lt.s32.totalorder %v579, %v580
    %v582 = vsel %vm581, %v579, %v580
    %v583 = vsel %vm497, %v557, 2147483647
    %vm584 = vcmp.lt.s32.totalorder %v583, %v559
    %v585 = vsel %vm584, %v583, %v559
    %v586 = vsel %vm500, %v561, 2147483647
    %vm587 = vcmp.lt.s32.totalorder %v585, %v586
    %v588 = vsel %vm587, %v585, %v586
    %v589 = vrot.slane %v588, 4
    %vm590 = vcmp.lt.s32.totalorder %v588, %v589
    %v591 = vsel %vm590, %v588, %v589
    %v592 = vrot.slane %v591, 2
    %vm593 = vcmp.lt.s32.totalorder %v591, %v592
    %v594 = vsel %vm593, %v591, %v592
    %v595 = vrot.slane %v594, 1
    %vm596 = vcmp.lt.s32.totalorder %v594, %v595
    %v597 = vsel %vm596, %v594, %v595
    %v598 = vsel %vm497, %v562, 2147483647
    %vm599 = vcmp.lt.s32.totalorder %v598, %v564
    %v600 = vsel %vm599, %v598, %v564
    %v601 = vsel %vm500, %v566, 2147483647
    %vm602 = vcmp.lt.s32.totalorder %v600, %v601
    %v603 = vsel %vm602, %v600, %v601
    %v604 = vrot.slane %v603, 4
    %vm605 = vcmp.lt.s32.totalorder %v603, %v604
    %v606 = vsel %vm605, %v603, %v604
    %v607 = vrot.slane %v606, 2
    %vm608 = vcmp.lt.s32.totalorder %v606, %v607
    %v609 = vsel %vm608, %v606, %v607
    %v610 = vrot.slane %v609, 1
    %vm611 = vcmp.lt.s32.totalorder %v609, %v610
    %v612 = vsel %vm611, %v609, %v610
    %v613 = vsel %vm497, %v563, 2147483647
    %vm614 = vcmp.lt.s32.totalorder %v613, %v565
    %v615 = vsel %vm614, %v613, %v565
    %v616 = vsel %vm500, %v567, 2147483647
    %vm617 = vcmp.lt.s32.totalorder %v615, %v616
    %v618 = vsel %vm617, %v615, %v616
    %v619 = vrot.slane %v618, 4
    %vm620 = vcmp.lt.s32.totalorder %v618, %v619
    %v621 = vsel %vm620, %v618, %v619
    %v622 = vrot.slane %v621, 2
    %vm623 = vcmp.lt.s32.totalorder %v621, %v622
    %v624 = vsel %vm623, %v621, %v622
    %v625 = vrot.slane %v624, 1
    %vm626 = vcmp.lt.s32.totalorder %v624, %v625
    %v627 = vsel %vm626, %v624, %v625
    %v628 = vadd.f32 %v508, %v518
    %v629 = vadd.f32 %v528, %v538
    %v630 = vcombine.low %v452, %v466
    %v632 = vunpack.c.l.s4 1983009808
    %v633 = vunpack.c.0.s8 %v632
    %v634 = vlaneseq
    %v635 = vshrl.u32 %v634, 7
    %v636 = vsub.s32 %v633, %v635
    %v637 = vrot.slane %v630, %v636
    %v638 = vcombine.low %v480, %v494
    %v640 = vunpack.c.l.s4 1983009808
    %v641 = vunpack.c.0.s8 %v640
    %v642 = vlaneseq
    %v643 = vshrl.u32 %v642, 7
    %v644 = vsub.s32 %v641, %v643
    %v645 = vrot.slane %v638, %v644
    %vm646 = vcmask 1044484
    %v647 = vsel %vm646, %v637, %v637
    %vm648 = vcmask 1046534
    %v649 = vsel %vm648, %v637, %v647
    %v650 = vrot.slane %v645, 7
    %vm651 = vcmask 1041409
    %v652 = vsel %vm651, %v650, %v649
    %vm653 = vcmask 1043459
    %v654 = vsel %vm653, %v650, %v652
    %vm655 = vcmask 1045509
    %v656 = vsel %vm655, %v650, %v654
    %vm657 = vcmask 1047559
    %v658 = vsel %vm657, %v650, %v656
    %659 = vst [vmem:[#allocation2] sm:$0xf] %v658
    %v660 = vcombine.low %v582, %v597
    %v662 = vunpack.c.l.s4 1983009808
    %v663 = vunpack.c.0.s8 %v662
    %v664 = vlaneseq
    %v665 = vshrl.u32 %v664, 7
    %v666 = vsub.s32 %v663, %v665
    %v667 = vrot.slane %v660, %v666
    %v668 = vcombine.low %v612, %v627
    %v670 = vunpack.c.l.s4 1983009808
    %v671 = vunpack.c.0.s8 %v670
    %v672 = vlaneseq
    %v673 = vshrl.u32 %v672, 7
    %v674 = vsub.s32 %v671, %v673
    %v675 = vrot.slane %v668, %v674
    %v676 = vsel %vm646, %v667, %v667
    %v677 = vsel %vm648, %v667, %v676
    %v678 = vrot.slane %v675, 7
    %v679 = vsel %vm651, %v678, %v677
    %v680 = vsel %vm653, %v678, %v679
    %v681 = vsel %vm655, %v678, %v680
    %v682 = vsel %vm657, %v678, %v681
    %683 = vst [vmem:[#allocation4] sm:$0xf] %v682
    %v686 = vsel %vm651, %v496, %v495
    %688 = vst [vmem:[#allocation6] sm:$0x3] %v686
    %v691 = vsel %vm651, %v629, %v628
    %693 = vst [vmem:[#allocation7] sm:$0x3] %v691
    // Predicated region
    $region14: #{tpu_custom_call.1} parent=1 // pred_check
      _
    $region15: #{tpu_custom_call.1} parent=1 // pred_check_branch
      %695 = sbr.rel (0) target = $region17
    $region16: #{tpu_custom_call.1} parent=1 // pred_region
      %s697 = ssub.s32 64, 64
      %698 = vsyncadd [#allocation3], %s697
      %s700 = sshll.u32 [#allocation2], 4
      %s701 = int_to_ptr.vmem [resolvable:$true] %s700
      %703 = dma.vmem_to_hbm [thread:$0]  %s701, 64, %s3, [#allocation3]
    $region17: #{tpu_custom_call.1} parent=1 // pred_fallthru
      _
    // Predicated region
    $region18: #{tpu_custom_call.1} parent=1 // pred_check
      _
    $region19: #{tpu_custom_call.1} parent=1 // pred_check_branch
      %705 = sbr.rel (0) target = $region21
    $region20: #{tpu_custom_call.1} parent=1 // pred_region
      %s707 = ssub.s32 64, 64
      %708 = vsyncadd [#allocation5], %s707
      %s710 = sshll.u32 [#allocation4], 4
      %s711 = int_to_ptr.vmem [resolvable:$true] %s710
      %713 = dma.vmem_to_hbm [thread:$0]  %s711, 64, %s4, [#allocation5]
    $region21: #{tpu_custom_call.1} parent=1 // pred_fallthru
      _
    // Predicated region
    $region22: #{tpu_custom_call.1} parent=1 // pred_check
      _
    $region23: #{tpu_custom_call.1} parent=1 // pred_check_branch
      %715 = sbr.rel (0) target = $region25
    $region24: #{tpu_custom_call.1} parent=1 // pred_region
      _
    $region25: #{tpu_custom_call.1} parent=1 // pred_fallthru
      _
    // Predicated region
    $region26: #{tpu_custom_call.1} parent=1 // pred_check
      _
    $region27: #{tpu_custom_call.1} parent=1 // pred_check_branch
      %717 = sbr.rel (0) target = $region29
    $region28: #{tpu_custom_call.1} parent=1 // pred_region
      %s719 = ssub.s32 32, 32
      %720 = vsyncadd [#allocation5], %s719
      %s722 = sshll.u32 [#allocation6], 4
      %s723 = int_to_ptr.vmem [resolvable:$true] %s722
      %725 = dma.vmem_to_hbm [thread:$0]  %s723, 32, %s6, [#allocation5]
    $region29: #{tpu_custom_call.1} parent=1 // pred_fallthru
      _
    // Predicated region
    $region30: #{tpu_custom_call.1} parent=1 // pred_check
      _
    $region31: #{tpu_custom_call.1} parent=1 // pred_check_branch
      %727 = sbr.rel (0) target = $region33
    $region32: #{tpu_custom_call.1} parent=1 // pred_region
      %s729 = ssub.s32 32, 32
      %730 = vsyncadd [#allocation8], %s729
      %s732 = sshll.u32 [#allocation7], 4
      %s733 = int_to_ptr.vmem [resolvable:$true] %s732
      %735 = dma.vmem_to_hbm [thread:$0]  %s733, 32, %s7, [#allocation8]
    $region33: #{tpu_custom_call.1} parent=1 // pred_fallthru
      _
    // Predicated region
    $region34: #{tpu_custom_call.1} parent=1 // pred_check
      _
    $region35: #{tpu_custom_call.1} parent=1 // pred_check_branch
      %737 = sbr.rel (0) target = $region37
    $region36: #{tpu_custom_call.1} parent=1 // pred_region
      %738 = dma.done [#allocation3], 64
    $region37: #{tpu_custom_call.1} parent=1 // pred_fallthru
      _
    // Predicated region
    $region38: #{tpu_custom_call.1} parent=1 // pred_check
      _
    $region39: #{tpu_custom_call.1} parent=1 // pred_check_branch
      %740 = sbr.rel (0) target = $region41
    $region40: #{tpu_custom_call.1} parent=1 // pred_region
      %741 = dma.done [#allocation5], 64
    $region41: #{tpu_custom_call.1} parent=1 // pred_fallthru
      _
    // Predicated region
    $region42: #{tpu_custom_call.1} parent=1 // pred_check
      _
    $region43: #{tpu_custom_call.1} parent=1 // pred_check_branch
      %743 = sbr.rel (0) target = $region45
    $region44: #{tpu_custom_call.1} parent=1 // pred_region
      _
    $region45: #{tpu_custom_call.1} parent=1 // pred_fallthru
      _
    // Predicated region
    $region46: #{tpu_custom_call.1} parent=1 // pred_check
      _
    $region47: #{tpu_custom_call.1} parent=1 // pred_check_branch
      %745 = sbr.rel (0) target = $region49
    $region48: #{tpu_custom_call.1} parent=1 // pred_region
      %746 = dma.done [#allocation5], 32
    $region49: #{tpu_custom_call.1} parent=1 // pred_fallthru
      _
    // Predicated region
    $region50: #{tpu_custom_call.1} parent=1 // pred_check
      _
    $region51: #{tpu_custom_call.1} parent=1 // pred_check_branch
      %748 = sbr.rel (0) target = $region53
    $region52: #{tpu_custom_call.1} parent=1 // pred_region
      %749 = dma.done [#allocation8], 32
    $region53: #{tpu_custom_call.1} parent=1 // pred_fallthru
      _
    %750 = vsyncpa [#allocation3], 1
    %751 = vsyncpa [#allocation5], 1
    %752 = vsyncpa [#allocation8], 1

</llo_original>
